<compile_context>
chip_gen: v7x
topology: tpu7x:2x2x1
jax: 0.10.0
libtpu: 0.0.40
codegen_flags: <defaults>
</compile_context>

<pallas_src>
import functools

import jax
import jax.numpy as jnp
from jax.experimental import pallas as pl
from jax.experimental.pallas import tpu as pltpu

C_IN = 64
C_HID = 32
C_OUT = 1


def _round_up(x, m):
    return ((x + m - 1) // m) * m


def _prediction_kernel(x_ref, w1_ref, b1_ref, w2_ref, b2_ref, o_ref):
    # x_ref:  (64, thw)  channels on sublanes, pixels on lanes
    # w1_ref: (32, 64), b1_ref: (32, 1)
    # w2_ref: (1, 32),  b2_ref: (1, 1)
    # o_ref:  (1, thw)
    h = jnp.dot(w1_ref[...], x_ref[...], preferred_element_type=jnp.float32)
    h = jnp.maximum(h + b1_ref[...], 0.0)                  # bias + ReLU in f32
    y = jnp.dot(w2_ref[...], h, preferred_element_type=jnp.float32)
    o_ref[...] = (y + b2_ref[...]).astype(o_ref.dtype)


@functools.partial(jax.jit, static_argnames=("tile_hw",))
def prediction_layer(x_nchw, w1, b1, w2, b2, *, tile_hw=8192):
    """_PredictionLayer forward pass.

    Args:
      x_nchw: (N, 64, H, W) float32
      w1: (32, 64)  conv1 weight, (out_ch, in_ch)  (torch 1x1 weight squeezed)
      b1: (32,)
      w2: (1, 32)   conv2 weight, (out_ch, in_ch)
      b2: (1,)
      tile_hw: max lane tile over the flattened spatial axis (multiple of 128)
    Returns:
      (N, 1, H, W) float32
    """
    N, C, H, W = x_nchw.shape
    assert C == C_IN
    HW = H * W

    # Lane-dense spatial tile, capped at the (128-padded) spatial extent so we
    # never allocate more VMEM than needed for small images.
    thw = min(tile_hw, _round_up(HW, 128))
    n_hw = pl.cdiv(HW, thw)

    x3 = x_nchw.reshape(N, C_IN, HW)          # free reshape, no data movement

    b1_2d = b1.reshape(C_HID, 1)
    b2_2d = b2.reshape(C_OUT, 1)

    out3 = pl.pallas_call(
        _prediction_kernel,
        out_shape=jax.ShapeDtypeStruct((N, C_OUT, HW), jnp.float32),
        grid_spec=pltpu.PrefetchScalarGridSpec(
            num_scalar_prefetch=0,
            grid=(N, n_hw),
            in_specs=[
                # Batch dim squeezed; spatial axis streams on the lanes.
                # Edge blocks (HW not a multiple of thw) are handled by
                # Pallas boundary masking -- no host-side padding pass.
                pl.BlockSpec((None, C_IN, thw), lambda n, j: (n, 0, j)),
                pl.BlockSpec((C_HID, C_IN), lambda n, j: (0, 0)),
                pl.BlockSpec((C_HID, 1), lambda n, j: (0, 0)),
                pl.BlockSpec((C_OUT, C_HID), lambda n, j: (0, 0)),
                pl.BlockSpec((C_OUT, 1), lambda n, j: (0, 0)),
            ],
            out_specs=pl.BlockSpec((None, C_OUT, thw), lambda n, j: (n, 0, j)),
        ),
        compiler_params=pltpu.CompilerParams(
            dimension_semantics=("parallel", "parallel"),
        ),
    )(x3, w1, b1_2d, w2, b2_2d)

    return out3.reshape(N, C_OUT, H, W)


def _reference(x_nchw, w1, b1, w2, b2):
    # Pure-JAX reference: 1x1 conv == channel matmul.
    N, C, H, W = x_nchw.shape
    x3 = x_nchw.reshape(N, C, H * W)
    h = jnp.maximum(jnp.einsum("oc,ncs->nos", w1, x3) + b1[None, :, None], 0.0)
    y = jnp.einsum("oc,ncs->nos", w2, h) + b2[None, :, None]
    return y.reshape(N, C_OUT, H, W)


if __name__ == "__main__":
    key = jax.random.PRNGKey(0)
    k_x, k_w1, k_b1, k_w2, k_b2, k_x2, k_x3 = jax.random.split(key, 7)

    # Parameters: same shapes as nn.Conv2d(64,32,1) / nn.Conv2d(32,1,1) with
    # the trailing 1x1 kernel dims squeezed away.
    w1 = jax.random.normal(k_w1, (C_HID, C_IN), dtype=jnp.float32) * 0.1
    b1 = jax.random.normal(k_b1, (C_HID,), dtype=jnp.float32) * 0.1
    w2 = jax.random.normal(k_w2, (C_OUT, C_HID), dtype=jnp.float32) * 0.1
    b2 = jax.random.normal(k_b2, (C_OUT,), dtype=jnp.float32) * 0.1

    # Small demo shape (batch=2, channels=64 as the module requires).
    N, H, W = 2, 16, 16
    x = jax.random.normal(k_x, (N, C_IN, H, W), dtype=jnp.float32)
    out = jax.block_until_ready(prediction_layer(x, w1, b1, w2, b2))
    assert out.shape == (N, 1, H, W)
    assert jnp.allclose(out, _reference(x, w1, b1, w2, b2), atol=1e-5, rtol=1e-5)

    # Ragged spatial size: exercises the masked edge-block path (real
    # SoccerMap is 104x68 = 7072 pixels, not a multiple of 128).
    N2, H2, W2 = 1, 13, 11
    x2 = jax.random.normal(k_x2, (N2, C_IN, H2, W2), dtype=jnp.float32)
    out2 = jax.block_until_ready(prediction_layer(x2, w1, b1, w2, b2))
    assert out2.shape == (N2, 1, H2, W2)
    assert jnp.allclose(out2, _reference(x2, w1, b1, w2, b2), atol=1e-5, rtol=1e-5)

    # Multi-tile + ragged tail: forces n_hw > 1 with a masked final block.
    N3, H3, W3 = 2, 20, 15   # HW = 300, tile_hw=128 -> 3 tiles, last has 44 valid
    x3 = jax.random.normal(k_x3, (N3, C_IN, H3, W3), dtype=jnp.float32)
    out3 = jax.block_until_ready(prediction_layer(x3, w1, b1, w2, b2, tile_hw=128))
    assert out3.shape == (N3, 1, H3, W3)
    assert jnp.allclose(out3, _reference(x3, w1, b1, w2, b2), atol=1e-5, rtol=1e-5)

    print("KERNEL_OK")
</pallas_src>

<mosaic_0001>
module attributes {stable_mosaic.version = 11 : i64} {
  func.func @_prediction_kernel(%arg0: i32, %arg1: i32, %arg2: memref<1x64x256xf32, #tpu.memory_space<vmem>>, %arg3: memref<32x64xf32, #tpu.memory_space<vmem>>, %arg4: memref<32x1xf32, #tpu.memory_space<vmem>>, %arg5: memref<1x32xf32, #tpu.memory_space<vmem>>, %arg6: memref<1x1xf32, #tpu.memory_space<vmem>>, %arg7: memref<1x1x256xf32, #tpu.memory_space<vmem>>) attributes {dimension_semantics = [#tpu.dimension_semantics<parallel>, #tpu.dimension_semantics<parallel>], iteration_bounds = array<i64: 2, 1>, scalar_prefetch = 0 : i64, scratch_operands = 0 : i64, tpu.core_type = #tpu.core_type<tc>, window_params = [{transform_indices = @transform_0, window_bounds = array<i64: 1, 64, 256>}, {pipeline_mode = #tpu.pipeline_mode<synchronous>, transform_indices = @transform_1, window_bounds = array<i64: 32, 64>}, {pipeline_mode = #tpu.pipeline_mode<synchronous>, transform_indices = @transform_2, window_bounds = array<i64: 32, 1>}, {pipeline_mode = #tpu.pipeline_mode<synchronous>, transform_indices = @transform_3, window_bounds = array<i64: 1, 32>}, {pipeline_mode = #tpu.pipeline_mode<synchronous>, transform_indices = @transform_4, window_bounds = array<i64: 1, 1>}, {transform_indices = @transform_5, window_bounds = array<i64: 1, 1, 256>}]} {
    %c0 = arith.constant 0 : index
    %c0_0 = arith.constant 0 : index
    %0 = vector.load %arg3[%c0, %c0_0] : memref<32x64xf32, #tpu.memory_space<vmem>>, vector<32x64xf32>
    %c0_1 = arith.constant 0 : index
    %c0_2 = arith.constant 0 : index
    %c0_3 = arith.constant 0 : index
    %1 = vector.load %arg2[%c0_1, %c0_2, %c0_3] : memref<1x64x256xf32, #tpu.memory_space<vmem>>, vector<1x64x256xf32>
    %2 = vector.shape_cast %1 : vector<1x64x256xf32> to vector<64x256xf32>
    %cst = arith.constant dense<0.000000e+00> : vector<32x256xf32>
    %3 = tpu.matmul %0, %2, %cst {dimension_numbers = #tpu.dot_dimension_numbers<[1], [0], [0], [1], [0, 0, 1, 1], [], []>} : vector<32x64xf32>, vector<64x256xf32>, vector<32x256xf32> -> vector<32x256xf32>
    %c0_4 = arith.constant 0 : index
    %c0_5 = arith.constant 0 : index
    %4 = vector.load %arg4[%c0_4, %c0_5] : memref<32x1xf32, #tpu.memory_space<vmem>>, vector<32x1xf32>
    %5 = vector.broadcast %4 : vector<32x1xf32> to vector<32x256xf32>
    %6 = arith.addf %3, %5 : vector<32x256xf32>
    %cst_6 = arith.constant 0.000000e+00 : f32
    %7 = vector.broadcast %cst_6 : f32 to vector<32x256xf32>
    %8 = arith.maximumf %6, %7 : vector<32x256xf32>
    %c0_7 = arith.constant 0 : index
    %c0_8 = arith.constant 0 : index
    %9 = vector.load %arg5[%c0_7, %c0_8] : memref<1x32xf32, #tpu.memory_space<vmem>>, vector<1x32xf32>
    %cst_9 = arith.constant dense<0.000000e+00> : vector<1x256xf32>
    %10 = tpu.matmul %9, %8, %cst_9 {dimension_numbers = #tpu.dot_dimension_numbers<[1], [0], [0], [1], [0, 0, 1, 1], [], []>} : vector<1x32xf32>, vector<32x256xf32>, vector<1x256xf32> -> vector<1x256xf32>
    %c0_10 = arith.constant 0 : index
    %c0_11 = arith.constant 0 : index
    %11 = vector.load %arg6[%c0_10, %c0_11] : memref<1x1xf32, #tpu.memory_space<vmem>>, vector<1x1xf32>
    %12 = vector.broadcast %11 : vector<1x1xf32> to vector<1x256xf32>
    %13 = arith.addf %10, %12 : vector<1x256xf32>
    %c0_12 = arith.constant 0 : index
    %c0_13 = arith.constant 0 : index
    %c0_14 = arith.constant 0 : index
    %14 = vector.load %arg7[%c0_12, %c0_13, %c0_14] : memref<1x1x256xf32, #tpu.memory_space<vmem>>, vector<1x1x256xf32>
    %15 = vector.shape_cast %14 : vector<1x1x256xf32> to vector<1x256xf32>
    %16 = vector.shape_cast %13 : vector<1x256xf32> to vector<1x1x256xf32>
    tpu.vector_store %arg7[%c0_12, %c0_13, %c0_14], %16 {strides = array<i32>} : memref<1x1x256xf32, #tpu.memory_space<vmem>>, vector<1x1x256xf32>,
    return
  }
  func.func @transform_0(%arg0: i32, %arg1: i32) -> (i32, i32, i32) {
    %c0_i32 = arith.constant 0 : i32
    %c0_i32_0 = arith.constant 0 : i32
    return %arg0, %c0_i32, %arg1 : i32, i32, i32
  }
  func.func @transform_1(%arg0: i32, %arg1: i32) -> (i32, i32) {
    %c0_i32 = arith.constant 0 : i32
    %c0_i32_0 = arith.constant 0 : i32
    %c0_i32_1 = arith.constant 0 : i32
    return %c0_i32, %c0_i32_0 : i32, i32
  }
  func.func @transform_2(%arg0: i32, %arg1: i32) -> (i32, i32) {
    %c0_i32 = arith.constant 0 : i32
    %c0_i32_0 = arith.constant 0 : i32
    %c0_i32_1 = arith.constant 0 : i32
    return %c0_i32, %c0_i32_0 : i32, i32
  }
  func.func @transform_3(%arg0: i32, %arg1: i32) -> (i32, i32) {
    %c0_i32 = arith.constant 0 : i32
    %c0_i32_0 = arith.constant 0 : i32
    %c0_i32_1 = arith.constant 0 : i32
    return %c0_i32, %c0_i32_0 : i32, i32
  }
  func.func @transform_4(%arg0: i32, %arg1: i32) -> (i32, i32) {
    %c0_i32 = arith.constant 0 : i32
    %c0_i32_0 = arith.constant 0 : i32
    %c0_i32_1 = arith.constant 0 : i32
    return %c0_i32, %c0_i32_0 : i32, i32
  }
  func.func @transform_5(%arg0: i32, %arg1: i32) -> (i32, i32, i32) {
    %c0_i32 = arith.constant 0 : i32
    %c0_i32_0 = arith.constant 0 : i32
    return %arg0, %c0_i32, %arg1 : i32, i32, i32
  }
}

</mosaic_0001>

<llo_original>
// kernel: prediction_layer.1
$region0: #{prediction_layer.1}
  #allocation0 [shape = 'u32[]', space=smem, size = 0x4, offset = 0x4, fixed_abs, tag = 'smem constant byte address 0x4 - core index']
  #allocation1 [shape = 'u32[144,128]{1,0:T(1,128)}', space=vmem, size = 0x12000, scoped, tag = 'internal scratch']
  #allocation2 [shape = 'f32[1,1]{1,0:T(1,128)S(1)}', space=vmem, size = 0x200, scoped, tag = 'scoped memory for prediction_layer.1']
  %s0 = inlined_call_operand.vmem [shape: f32[2,64,256], index: 0, kind: input, shape index: {}]
  %s1 = inlined_call_operand.vmem [shape: f32[32,64], index: 1, kind: input, shape index: {}]
  %s2 = inlined_call_operand.vmem [shape: f32[32,1], index: 2, kind: input, shape index: {}]
  %s3 = inlined_call_operand.vmem [shape: f32[1,32], index: 3, kind: input, shape index: {}]
  %s4 = inlined_call_operand.<no memory space> [shape: f32[1,1], index: 4, kind: input, shape index: {}]
  %s5 = inlined_call_operand.vmem [shape: f32[2,1,256], index: 5, kind: output, shape index: {}]
  %s6 = sld [smem:[#allocation0]]
  $region53: #{prediction_layer.1} parent=0
    _
  %s8 = ssub.s32 1, %s6
  %s9 = scalar_select 0, %s8, %s6
  %v10 = vstv %s4
  %11 = vst [vmem:[#allocation2] sm:$0x1] %v10
  loop: start=0, step=1, limit=4
  $region2: #{prediction_layer.1} parent=0 // loop_pre_header
    _
  $region3: #{prediction_layer.1} parent=0 // loop_header
    %s13 = sphi 0, %s17
    %p14 = scmp.ge.s32.totalorder %s13, 4
    %s20 = sphi 0, %s32
    %s21 = sphi 0, %s28
    %s22 = sphi 0, %s20
    %s23 = sphi 0, %s21
    %s24 = sphi 0, %s22
    %s25 = sphi 0, %s23
    %s37 = sphi 0, %s39
    %s40 = sphi 0, %s37
    %s41 = sphi 0, %s40
    %s57 = sphi 0, %s41
    %s61 = sphi 0, %s61
    %s63 = sphi 0, %s61
    %s64 = sphi 0, %s63
    %s78 = sphi 0, %s64
    %s82 = sphi 0, %s82
    %s84 = sphi 0, %s82
    %s85 = sphi 0, %s84
    %s99 = sphi 0, %s85
    %s103 = sphi 0, %s103
    %s105 = sphi 0, %s103
    %s106 = sphi 0, %s105
    %s120 = sphi 0, %s106
    %s124 = sphi 0, %s124
    %s126 = sphi 0, %s124
    %s127 = sphi 0, %s126
    %s141 = sphi 0, %s127
    %s149 = sphi 0, %s151
    %s152 = sphi 0, %s149
    %s153 = sphi 0, %s152
    %s169 = sphi 0, %s153
  $region4: #{prediction_layer.1} parent=0 // loop_header_branch
    %16 = sbr.rel (%p14) target = $region8
  $region5: #{prediction_layer.1} parent=0 // loop_body
    %s18 = ssub.s32 %s13, 1
    %s19 = ssub.s32 %s13, 2
    %s26 = sadd.s32 1, %s21
    %p27 = scmp.ge.s32.totalorder %s26, 1
    %s28 = scalar_select %p27, 0, %s26
    %s29 = sadd.s32 1, %s20
    %s30 = scalar_select %p27, %s29, %s20
    %p31 = scmp.ge.s32.totalorder %s30, 2
    %s32 = scalar_select %p31, 0, %s30
    %s33 = ssub.s32 %s20, %s32
    %s34 = ssub.s32 %s21, %s28
    %s35 = sor.u32 %s33, %s34
    %p36 = scmp.eq.s32.totalorder %s35, 0
    %s38 = sadd.s32 %s37, 1
    %s39 = scalar_select %p36, %s37, %s38
    %p42 = pneg %p36
    %p43 = scmp.eq.s32.totalorder %s13, 1
    %p44 = por %p42, %p43
    %p45 = scmp.ne.s32.totalorder %s37, %s40
    %p46 = scmp.eq.s32.totalorder %s13, 0
    %p47 = por %p45, %p46
    %p48 = scmp.ne.s32.totalorder %s37, %s40
    %p49 = scmp.eq.s32.totalorder %s18, 1
    %p50 = por %p48, %p49
    %p51 = scmp.ne.s32.totalorder %s40, %s41
    %p52 = scmp.eq.s32.totalorder %s18, 0
    %p53 = por %p51, %p52
    %p54 = scmp.ne.s32.totalorder %s40, %s41
    %p55 = scmp.eq.s32.totalorder %s19, 1
    %p56 = por %p54, %p55
    %p58 = scmp.ne.s32.totalorder %s41, %s57
    %p59 = scmp.eq.s32.totalorder %s19, 0
    %p60 = por %p58, %p59
    %s62 = sadd.s32 %s61, 1
    %p65 = scmp.eq.s32.totalorder %s13, 1
    %p66 = scmp.ne.s32.totalorder %s61, %s63
    %p67 = scmp.eq.s32.totalorder %s13, 0
    %p68 = por %p66, %p67
    %p69 = scmp.ne.s32.totalorder %s61, %s63
    %p70 = scmp.eq.s32.totalorder %s18, 1
    %p71 = por %p69, %p70
    %p72 = scmp.ne.s32.totalorder %s63, %s64
    %p73 = scmp.eq.s32.totalorder %s18, 0
    %p74 = por %p72, %p73
    %p75 = scmp.ne.s32.totalorder %s63, %s64
    %p76 = scmp.eq.s32.totalorder %s19, 1
    %p77 = por %p75, %p76
    %p79 = scmp.ne.s32.totalorder %s64, %s78
    %p80 = scmp.eq.s32.totalorder %s19, 0
    %p81 = por %p79, %p80
    %s83 = sadd.s32 %s82, 1
    %p86 = scmp.eq.s32.totalorder %s13, 1
    %p87 = scmp.ne.s32.totalorder %s82, %s84
    %p88 = scmp.eq.s32.totalorder %s13, 0
    %p89 = por %p87, %p88
    %p90 = scmp.ne.s32.totalorder %s82, %s84
    %p91 = scmp.eq.s32.totalorder %s18, 1
    %p92 = por %p90, %p91
    %p93 = scmp.ne.s32.totalorder %s84, %s85
    %p94 = scmp.eq.s32.totalorder %s18, 0
    %p95 = por %p93, %p94
    %p96 = scmp.ne.s32.totalorder %s84, %s85
    %p97 = scmp.eq.s32.totalorder %s19, 1
    %p98 = por %p96, %p97
    %p100 = scmp.ne.s32.totalorder %s85, %s99
    %p101 = scmp.eq.s32.totalorder %s19, 0
    %p102 = por %p100, %p101
    %s104 = sadd.s32 %s103, 1
    %p107 = scmp.eq.s32.totalorder %s13, 1
    %p108 = scmp.ne.s32.totalorder %s103, %s105
    %p109 = scmp.eq.s32.totalorder %s13, 0
    %p110 = por %p108, %p109
    %p111 = scmp.ne.s32.totalorder %s103, %s105
    %p112 = scmp.eq.s32.totalorder %s18, 1
    %p113 = por %p111, %p112
    %p114 = scmp.ne.s32.totalorder %s105, %s106
    %p115 = scmp.eq.s32.totalorder %s18, 0
    %p116 = por %p114, %p115
    %p117 = scmp.ne.s32.totalorder %s105, %s106
    %p118 = scmp.eq.s32.totalorder %s19, 1
    %p119 = por %p117, %p118
    %p121 = scmp.ne.s32.totalorder %s106, %s120
    %p122 = scmp.eq.s32.totalorder %s19, 0
    %p123 = por %p121, %p122
    %s125 = sadd.s32 %s124, 1
    %p128 = scmp.eq.s32.totalorder %s13, 1
    %p129 = scmp.ne.s32.totalorder %s124, %s126
    %p130 = scmp.eq.s32.totalorder %s13, 0
    %p131 = por %p129, %p130
    %p132 = scmp.ne.s32.totalorder %s124, %s126
    %p133 = scmp.eq.s32.totalorder %s18, 1
    %p134 = por %p132, %p133
    %p135 = scmp.ne.s32.totalorder %s126, %s127
    %p136 = scmp.eq.s32.totalorder %s18, 0
    %p137 = por %p135, %p136
    %p138 = scmp.ne.s32.totalorder %s126, %s127
    %p139 = scmp.eq.s32.totalorder %s19, 1
    %p140 = por %p138, %p139
    %p142 = scmp.ne.s32.totalorder %s127, %s141
    %p143 = scmp.eq.s32.totalorder %s19, 0
    %p144 = por %p142, %p143
    %s145 = ssub.s32 %s20, %s32
    %s146 = ssub.s32 %s21, %s28
    %s147 = sor.u32 %s145, %s146
    %p148 = scmp.eq.s32.totalorder %s147, 0
    %s150 = sadd.s32 %s149, 1
    %s151 = scalar_select %p148, %s149, %s150
    %p154 = pneg %p148
    %p155 = scmp.eq.s32.totalorder %s13, 1
    %p156 = por %p154, %p155
    %p157 = scmp.ne.s32.totalorder %s149, %s152
    %p158 = scmp.eq.s32.totalorder %s13, 0
    %p159 = por %p157, %p158
    %p160 = scmp.ne.s32.totalorder %s149, %s152
    %p161 = scmp.eq.s32.totalorder %s18, 1
    %p162 = por %p160, %p161
    %p163 = scmp.ne.s32.totalorder %s152, %s153
    %p164 = scmp.eq.s32.totalorder %s18, 0
    %p165 = por %p163, %p164
    %p166 = scmp.ne.s32.totalorder %s152, %s153
    %p167 = scmp.eq.s32.totalorder %s19, 1
    %p168 = por %p166, %p167
    %p170 = scmp.ne.s32.totalorder %s153, %s169
    %p171 = scmp.eq.s32.totalorder %s19, 0
    %p172 = por %p170, %p171
    %p173 = scmp.le.s32.totalorder 1, %s13
    %p174 = scmp.lt.s32.totalorder %s13, 3
    %p175 = pnand %p173, %p174
    %p176 = pneg %p175
    // Predicated region
    $region9: #{prediction_layer.1} parent=5 // pred_check
      _
    $region10: #{prediction_layer.1} parent=5 // pred_check_branch
      %178 = sbr.rel (%p175) target = $region12
    $region11: #{prediction_layer.1} parent=5 // pred_region
      %s179 = ssub.s32 %s13, 1
      // Predicated region
      $region13: #{prediction_layer.1} parent=11 // pred_check
        %p180 = pneg %p74
      $region14: #{prediction_layer.1} parent=11 // pred_check_branch
        %182 = sbr.rel (%p180) target = $region16
      $region15: #{prediction_layer.1} parent=11 // pred_region
        _
      $region16: #{prediction_layer.1} parent=11 // pred_fallthru
        _
      // Predicated region
      $region17: #{prediction_layer.1} parent=11 // pred_check
        %p183 = pneg %p95
      $region18: #{prediction_layer.1} parent=11 // pred_check_branch
        %185 = sbr.rel (%p183) target = $region20
      $region19: #{prediction_layer.1} parent=11 // pred_region
        _
      $region20: #{prediction_layer.1} parent=11 // pred_fallthru
        _
      // Predicated region
      $region21: #{prediction_layer.1} parent=11 // pred_check
        %p186 = pneg %p116
      $region22: #{prediction_layer.1} parent=11 // pred_check_branch
        %188 = sbr.rel (%p186) target = $region24
      $region23: #{prediction_layer.1} parent=11 // pred_region
        _
      $region24: #{prediction_layer.1} parent=11 // pred_fallthru
        _
      // Predicated region
      $region25: #{prediction_layer.1} parent=11 // pred_check
        %p189 = pneg %p137
      $region26: #{prediction_layer.1} parent=11 // pred_check_branch
        %191 = sbr.rel (%p189) target = $region28
      $region27: #{prediction_layer.1} parent=11 // pred_region
        _
      $region28: #{prediction_layer.1} parent=11 // pred_fallthru
        _
    $region12: #{prediction_layer.1} parent=5 // pred_fallthru
      _
    %p192 = scmp.lt.s32.totalorder %s13, 2
    // Predicated region
    $region29: #{prediction_layer.1} parent=5 // pred_check
      %p193 = pneg %p192
    $region30: #{prediction_layer.1} parent=5 // pred_check_branch
      %195 = sbr.rel (%p193) target = $region32
    $region31: #{prediction_layer.1} parent=5 // pred_region
      // Predicated region
      $region33: #{prediction_layer.1} parent=31 // pred_check
        %p196 = pneg %p47
      $region34: #{prediction_layer.1} parent=31 // pred_check_branch
        %198 = sbr.rel (%p196) target = $region36
      $region35: #{prediction_layer.1} parent=31 // pred_region
        %s199 = smul.u32 2, %s21
        %p200 = scmp.lt.s32.totalorder %s20, 1
        %s201 = scalar_select %p200, %s20, 1
        %p202 = scmp.lt.s32.totalorder %s199, 1
        %s203 = scalar_select %p202, %s199, 1
        %s204 = smul.addr %s201, 16
        %s205 = sadd.s32 %s203, %s204
        %s206 = smul.addr %s205, 8
        %s207 = scalar_lea.vmem %s0, %s206
        %s208 = smul.u32 2, %s21
      $region36: #{prediction_layer.1} parent=31 // pred_fallthru
        _
    $region32: #{prediction_layer.1} parent=5 // pred_fallthru
      _
    %p209 = scmp.le.s32.totalorder 1, %s13
    %p210 = scmp.lt.s32.totalorder %s13, 3
    %p211 = pnand %p209, %p210
    %p212 = pneg %p211
    // Predicated region
    $region37: #{prediction_layer.1} parent=5 // pred_check
      _
    $region38: #{prediction_layer.1} parent=5 // pred_check_branch
      %214 = sbr.rel (%p211) target = $region40
    $region39: #{prediction_layer.1} parent=5 // pred_region
      %s215 = ssub.s32 %s13, 1
      %s216 = smul.u32 2, %s23
      %p217 = scmp.lt.s32.totalorder %s22, 1
      %s218 = scalar_select %p217, %s22, 1
      %p219 = scmp.lt.s32.totalorder %s216, 1
      %s220 = scalar_select %p219, %s216, 1
      %s221 = smul.addr %s218, 16
      %s222 = sadd.s32 %s220, %s221
      %s223 = smul.addr %s222, 8
      %s224 = scalar_lea.vmem %s0, %s223
      %p225 = pneg %p53
      %p226 = pneg %p50
      %p227 = pneg %p74
      %p228 = pneg %p71
      %p229 = pneg %p95
      %p230 = pneg %p92
      %p231 = pneg %p116
      %p232 = pneg %p113
      %p233 = pneg %p137
      %p234 = pneg %p134
      %p235 = pneg %p165
      %p236 = pneg %p162
      %s237 = smul.u32 2, %s23
      %p238 = scmp.lt.s32.totalorder %s22, 1
      %s239 = scalar_select %p238, %s22, 1
      %p240 = scmp.lt.s32.totalorder %s237, 1
      %s241 = scalar_select %p240, %s237, 1
      %s242 = smul.addr %s239, 2
      %s243 = sadd.s32 %s241, %s242
      %s244 = scalar_lea.vmem %s5, %s243
      %s245 = smul.u32 2, %s23
      %p246 = scmp.lt.s32.totalorder %s22, 1
      %s247 = scalar_select %p246, %s22, 1
      %p248 = scmp.lt.s32.totalorder %s245, 1
      %s249 = scalar_select %p248, %s245, 1
      %s250 = smul.addr %s247, 16
      %s251 = sadd.s32 %s249, %s250
      %s252 = smul.addr %s251, 8
      %s253 = scalar_lea.vmem %s0, %s252
      %s254 = smul.u32 2, %s23
      %s255 = smul.u32 2, %s23
      %p256 = scmp.lt.s32.totalorder %s22, 1
      %s257 = scalar_select %p256, %s22, 1
      %p258 = scmp.lt.s32.totalorder %s255, 1
      %s259 = scalar_select %p258, %s255, 1
      %s260 = smul.addr %s257, 2
      %s261 = sadd.s32 %s259, %s260
      %s262 = scalar_lea.vmem %s5, %s261
      %s263 = smul.u32 2, %s23
      %v264 = vld [vmem:[%s1] sm:$0xff]
      %v265 = vld [vmem:[%s1 + $0x8] sm:$0xff]
      %v266 = vld [vmem:[%s1 + $0x10] sm:$0xff]
      %v267 = vld [vmem:[%s1 + $0x18] sm:$0xff]
      %v268 = vld [vmem:[%s253] sm:$0xff]
      %v269 = vld [vmem:[%s253 + $0x8] sm:$0xff]
      %v270 = vld [vmem:[%s253 + $0x10] sm:$0xff]
      %v271 = vld [vmem:[%s253 + $0x18] sm:$0xff]
      %v272 = vld [vmem:[%s253 + $0x20] sm:$0xff]
      %v273 = vld [vmem:[%s253 + $0x28] sm:$0xff]
      %v274 = vld [vmem:[%s253 + $0x30] sm:$0xff]
      %v275 = vld [vmem:[%s253 + $0x38] sm:$0xff]
      %v276 = vld [vmem:[%s253 + $0x40] sm:$0xff]
      %v277 = vld [vmem:[%s253 + $0x48] sm:$0xff]
      %v278 = vld [vmem:[%s253 + $0x50] sm:$0xff]
      %v279 = vld [vmem:[%s253 + $0x58] sm:$0xff]
      %v280 = vld [vmem:[%s253 + $0x60] sm:$0xff]
      %v281 = vld [vmem:[%s253 + $0x68] sm:$0xff]
      %v282 = vld [vmem:[%s253 + $0x70] sm:$0xff]
      %v283 = vld [vmem:[%s253 + $0x78] sm:$0xff]
      %v284 = vld [vmem:[%s2] sm:$0xff]
      %v285 = vld [vmem:[%s2 + $0x8] sm:$0xff]
      %v286 = vld [vmem:[%s2 + $0x10] sm:$0xff]
      %v287 = vld [vmem:[%s2 + $0x18] sm:$0xff]
      %289 = vset.pattern.permute.xlu0 0
      %290 = vperm.xlu0 %289, %v284
      %v291 = vpop.permute.xlu0 %290
      %294 = vset.pattern.permute.xlu0 0
      %295 = vperm.xlu0 %294, %v285
      %v296 = vpop.permute.xlu0 %295
      %299 = vset.pattern.permute.xlu0 0
      %300 = vperm.xlu0 %299, %v286
      %v301 = vpop.permute.xlu0 %300
      %304 = vset.pattern.permute.xlu0 0
      %305 = vperm.xlu0 %304, %v287
      %v306 = vpop.permute.xlu0 %305
      %vm308 = vcmask 523264
      %v310 = vsel %vm308, %v264, 0
      %v313 = vsel %vm308, %v265, 0
      %v316 = vsel %vm308, %v266, 0
      %v319 = vsel %vm308, %v267, 0
      %321 = vmatprep.subr.mxu0 %v269
      %322 = vmatpush1.msra.mxu0 %v268
      %323 = vmatprep.subr.mxu0 %v271
      %324 = vmatpush1.msra.mxu0 %v270
      %325 = vmatprep.subr.mxu0 %v273
      %326 = vmatpush1.msra.mxu0 %v272
      %327 = vmatprep.subr.mxu0 %v275
      %328 = vmatpush1.msra.mxu0 %v274
      %329 = vmatprep.subr.mxu0 %v277
      %330 = vmatpush1.msra.mxu0 %v276
      %331 = vmatprep.subr.mxu0 %v279
      %332 = vmatpush1.msra.mxu0 %v278
      %333 = vmatprep.subr.mxu0 %v281
      %334 = vmatpush1.msra.mxu0 %v280
      %335 = vmatprep.subr.mxu0 %v283
      %336 = vmatpush1.msra.mxu0 %v282
      %337 = vmatprep.subr.mxu0 0.0
      %338 = vmatpush1.msra.mxu0 0.0
      %339 = vmatprep.subr.mxu0 0.0
      %340 = vmatpush1.msra.mxu0 0.0
      %341 = vmatprep.subr.mxu0 0.0
      %342 = vmatpush1.msra.mxu0 0.0
      %343 = vmatprep.subr.mxu0 0.0
      %344 = vmatpush1.msra.mxu0 0.0
      %345 = vmatprep.subr.mxu0 0.0
      %346 = vmatpush1.msra.mxu0 0.0
      %347 = vmatprep.subr.mxu0 0.0
      %348 = vmatpush1.msra.mxu0 0.0
      %349 = vmatprep.subr.mxu0 0.0
      %350 = vmatpush1.msra.mxu0 0.0
      %351 = vmatprep.subr.mxu0 0.0
      %352 = vmatpush1.msra.mxu0 0.0
      %353 = vmatprep.subr.mxu0 0.0
      %354 = vmatpush1.msra.mxu0 0.0
      %355 = vmatprep.subr.mxu0 0.0
      %356 = vmatpush1.msra.mxu0 0.0
      %357 = vmatprep.subr.mxu0 0.0
      %358 = vmatpush1.msra.mxu0 0.0
      %359 = vmatprep.subr.mxu0 0.0
      %360 = vmatpush1.msra.mxu0 0.0
      %361 = vmatprep.subr.mxu0 0.0
      %362 = vmatpush1.msra.mxu0 0.0
      %363 = vmatprep.subr.mxu0 0.0
      %364 = vmatpush1.msra.mxu0 0.0
      %365 = vmatprep.subr.mxu0 0.0
      %366 = vmatpush1.msra.mxu0 0.0
      %367 = vmatprep.subr.mxu0 0.0
      %368 = vmatpush1.msra.mxu0 0.0
      %369 = vmatprep.subr.mxu0 0.0
      %370 = vmatpush1.msra.mxu0 0.0
      %371 = vmatprep.subr.mxu0 0.0
      %372 = vmatpush1.msra.mxu0 0.0
      %373 = vmatprep.subr.mxu0 0.0
      %374 = vmatpush1.msra.mxu0 0.0
      %375 = vmatprep.subr.mxu0 0.0
      %376 = vmatpush1.msra.mxu0 0.0
      %377 = vmatprep.subr.mxu0 0.0
      %378 = vmatpush1.msra.mxu0 0.0
      %379 = vmatprep.subr.mxu0 0.0
      %380 = vmatpush1.msra.mxu0 0.0
      %381 = vmatprep.subr.mxu0 0.0
      %382 = vmatpush1.msra.mxu0 0.0
      %383 = vmatprep.subr.mxu0 0.0
      %384 = vmatpush1.msra.mxu0 0.0
      %385 = vmatprep.mubr.f32.mxu0 0.0
      %386 = vmatmul.mubr.f32.gmra.mrb[0].mxu0 %v310
      %v387 = vpop.f32.mrb[0].mxu0
      %v388 = vadd.f32 %v291, %v387
      %v389 = vpop.f32.mrb[0].mxu0
      %v390 = vadd.f32 %v291, %v389
      %391 = vmatprep.mubr.f32.mxu0 0.0
      %392 = vmatmul.mubr.f32.gmra.mrb[0].mxu0 %v313
      %v393 = vpop.f32.mrb[0].mxu0
      %v394 = vadd.f32 %v296, %v393
      %v395 = vpop.f32.mrb[0].mxu0
      %v396 = vadd.f32 %v296, %v395
      %397 = vmatprep.mubr.f32.mxu0 0.0
      %398 = vmatmul.mubr.f32.gmra.mrb[0].mxu0 %v316
      %v399 = vpop.f32.mrb[0].mxu0
      %v400 = vadd.f32 %v301, %v399
      %v401 = vpop.f32.mrb[0].mxu0
      %v402 = vadd.f32 %v301, %v401
      %403 = vmatprep.mubr.f32.mxu0 0.0
      %404 = vmatmul.mubr.f32.gmra.mrb[0].mxu0 %v319
      %v405 = vpop.f32.mrb[0].mxu0
      %v406 = vadd.f32 %v306, %v405
      %v407 = vpop.f32.mrb[0].mxu0
      %v408 = vadd.f32 %v306, %v407
      %409 = vdwg.mxu0
      %v410 = vmax.f32 %v388, 0.0
      %v411 = vmax.f32 %v390, 0.0
      %v412 = vmax.f32 %v394, 0.0
      %v413 = vmax.f32 %v396, 0.0
      %v414 = vmax.f32 %v400, 0.0
      %v415 = vmax.f32 %v402, 0.0
      %v416 = vmax.f32 %v406, 0.0
      %v417 = vmax.f32 %v408, 0.0
      %v418 = vld [vmem:[%s3] sm:$0x1]
      %v419 = vld [vmem:[#allocation2] sm:$0x1]
      %421 = vset.pattern.permute.xlu0 0
      %422 = vperm.xlu0 %421, %v419
      %v423 = vpop.permute.xlu0 %422
      %v425 = vlaneseq
      %v426 = vshrl.u32 %v425, 7
      %v427 = vsub.s32 0, %v426
      %v428 = vrot.slane %v423, %v427
      %vm429 = vcmask 261120
      %v431 = vsel %vm429, %v418, 0
      %433 = vmatprep.subr.mxu0 %v411
      %434 = vmatpush1.msra.mxu0 %v410
      %435 = vmatprep.subr.mxu0 %v413
      %436 = vmatpush1.msra.mxu0 %v412
      %437 = vmatprep.subr.mxu0 %v415
      %438 = vmatpush1.msra.mxu0 %v414
      %439 = vmatprep.subr.mxu0 %v417
      %440 = vmatpush1.msra.mxu0 %v416
      %441 = vmatprep.subr.mxu0 0.0
      %442 = vmatpush1.msra.mxu0 0.0
      %443 = vmatprep.subr.mxu0 0.0
      %444 = vmatpush1.msra.mxu0 0.0
      %445 = vmatprep.subr.mxu0 0.0
      %446 = vmatpush1.msra.mxu0 0.0
      %447 = vmatprep.subr.mxu0 0.0
      %448 = vmatpush1.msra.mxu0 0.0
      %449 = vmatprep.subr.mxu0 0.0
      %450 = vmatpush1.msra.mxu0 0.0
      %451 = vmatprep.subr.mxu0 0.0
      %452 = vmatpush1.msra.mxu0 0.0
      %453 = vmatprep.subr.mxu0 0.0
      %454 = vmatpush1.msra.mxu0 0.0
      %455 = vmatprep.subr.mxu0 0.0
      %456 = vmatpush1.msra.mxu0 0.0
      %457 = vmatprep.subr.mxu0 0.0
      %458 = vmatpush1.msra.mxu0 0.0
      %459 = vmatprep.subr.mxu0 0.0
      %460 = vmatpush1.msra.mxu0 0.0
      %461 = vmatprep.subr.mxu0 0.0
      %462 = vmatpush1.msra.mxu0 0.0
      %463 = vmatprep.subr.mxu0 0.0
      %464 = vmatpush1.msra.mxu0 0.0
      %465 = vmatprep.subr.mxu0 0.0
      %466 = vmatpush1.msra.mxu0 0.0
      %467 = vmatprep.subr.mxu0 0.0
      %468 = vmatpush1.msra.mxu0 0.0
      %469 = vmatprep.subr.mxu0 0.0
      %470 = vmatpush1.msra.mxu0 0.0
      %471 = vmatprep.subr.mxu0 0.0
      %472 = vmatpush1.msra.mxu0 0.0
      %473 = vmatprep.subr.mxu0 0.0
      %474 = vmatpush1.msra.mxu0 0.0
      %475 = vmatprep.subr.mxu0 0.0
      %476 = vmatpush1.msra.mxu0 0.0
      %477 = vmatprep.subr.mxu0 0.0
      %478 = vmatpush1.msra.mxu0 0.0
      %479 = vmatprep.subr.mxu0 0.0
      %480 = vmatpush1.msra.mxu0 0.0
      %481 = vmatprep.subr.mxu0 0.0
      %482 = vmatpush1.msra.mxu0 0.0
      %483 = vmatprep.subr.mxu0 0.0
      %484 = vmatpush1.msra.mxu0 0.0
      %485 = vmatprep.subr.mxu0 0.0
      %486 = vmatpush1.msra.mxu0 0.0
      %487 = vmatprep.subr.mxu0 0.0
      %488 = vmatpush1.msra.mxu0 0.0
      %489 = vmatprep.subr.mxu0 0.0
      %490 = vmatpush1.msra.mxu0 0.0
      %491 = vmatprep.subr.mxu0 0.0
      %492 = vmatpush1.msra.mxu0 0.0
      %493 = vmatprep.subr.mxu0 0.0
      %494 = vmatpush1.msra.mxu0 0.0
      %495 = vmatprep.subr.mxu0 0.0
      %496 = vmatpush1.msra.mxu0 0.0
      %497 = vmatprep.mubr.f32.mxu0 0.0
      %498 = vmatmul.mubr.f32.gmra.mrb[0].mxu0 %v431
      %v499 = vpop.f32.mrb[0].mxu0
      %v500 = vadd.f32 %v428, %v499
      %v501 = vpop.f32.mrb[0].mxu0
      %v502 = vadd.f32 %v428, %v501
      %503 = vdwg.mxu0
      %v506 = vcombine.low %v500, %v502
      %v508 = vunpack.c.l.s4 1966171168
      %v509 = vunpack.c.0.s8 %v508
      %v510 = vlaneseq
      %v511 = vshrl.u32 %v510, 7
      %v512 = vsub.s32 %v509, %v511
      %v513 = vrot.slane %v506, %v512
      %v515 = vunpack.c.l.s4 1966171168
      %v516 = vunpack.c.0.s8 %v515
      %v517 = vlaneseq
      %v518 = vshrl.u32 %v517, 7
      %v519 = vsub.s32 %v516, %v518
      %v520 = vrot.slane %v513, %v519
      %v522 = vlaneseq
      %vm523 = vcmp.ge.s32.totalorder %v522, 0
      %vm524 = vcmp.lt.s32.totalorder %v522, 256
      %vm525 = vmand %vm523, %vm524
      %526 = vst.msk [vmem:[%s262] sm:$0x3] %vm525, %v520
      %s527 = smul.u32 2, %s23
      %p528 = scmp.lt.s32.totalorder %s22, 1
      %s529 = scalar_select %p528, %s22, 1
      %p530 = scmp.lt.s32.totalorder %s527, 1
      %s531 = scalar_select %p530, %s527, 1
      %s532 = smul.addr %s529, 2
      %s533 = sadd.s32 %s531, %s532
      %s534 = scalar_lea.vmem %s5, %s533
      // Predicated region
      $region41: #{prediction_layer.1} parent=39 // pred_check
        %p535 = pneg %p162
      $region42: #{prediction_layer.1} parent=39 // pred_check_branch
        %537 = sbr.rel (%p535) target = $region44
      $region43: #{prediction_layer.1} parent=39 // pred_region
        %s538 = smul.u32 2, %s23
      $region44: #{prediction_layer.1} parent=39 // pred_fallthru
        _
    $region40: #{prediction_layer.1} parent=5 // pred_fallthru
      _
    %p539 = scmp.le.s32.totalorder 2, %s13
    // Predicated region
    $region45: #{prediction_layer.1} parent=5 // pred_check
      %p540 = pneg %p539
    $region46: #{prediction_layer.1} parent=5 // pred_check_branch
      %542 = sbr.rel (%p540) target = $region48
    $region47: #{prediction_layer.1} parent=5 // pred_region
      %s543 = ssub.s32 %s13, 2
      // Predicated region
      $region49: #{prediction_layer.1} parent=47 // pred_check
        %p544 = pneg %p168
      $region50: #{prediction_layer.1} parent=47 // pred_check_branch
        %546 = sbr.rel (%p544) target = $region52
      $region51: #{prediction_layer.1} parent=47 // pred_region
        %s547 = smul.u32 2, %s25
        %p548 = scmp.lt.s32.totalorder %s24, 1
        %s549 = scalar_select %p548, %s24, 1
        %p550 = scmp.lt.s32.totalorder %s547, 1
        %s551 = scalar_select %p550, %s547, 1
        %s552 = smul.addr %s549, 2
        %s553 = sadd.s32 %s551, %s552
        %s554 = scalar_lea.vmem %s5, %s553
      $region52: #{prediction_layer.1} parent=47 // pred_fallthru
        _
    $region48: #{prediction_layer.1} parent=5 // pred_fallthru
      _
  $region6: #{prediction_layer.1} parent=0 // loop_footer
    %s17 = sadd.s32 1, %s13
  $region7: #{prediction_layer.1} parent=0 // loop_footer_branch
    %12 = sbr.rel target = $region3
  $region8: #{prediction_layer.1} parent=0 // loop_exit
    _

</llo_original>
